<compile_context>
chip_gen: v7x
topology: tpu7x:2x2x1
jax: 0.10.0
libtpu: 0.0.40
codegen_flags: <defaults>
</compile_context>

<pallas_src>
import jax
import jax.numpy as jnp
from jax.experimental import pallas as pl
from jax.experimental.pallas import tpu as pltpu

LANE = 128


def _round_up(n, m):
    return (n + m - 1) // m * m


def _base_model_kernel(x_ref, w_ref, b_ref, logits_ref, pred_ref, prob_ref):
    # x: [TB, F] (stored dtype), w: [F, Cpad] bf16,
    # b: [1, Cpad] f32 with -1e30 on padded class columns.

    # forward(): logits = flatten(x) @ W + b.  Cast x -> bf16 here (VPU cast,
    # hidden under the x DMA) so the wrapper never rewrites x in HBM.
    x = x_ref[...].astype(jnp.bfloat16)
    logits = jnp.dot(x, w_ref[...], preferred_element_type=jnp.float32) + b_ref[...]
    logits_ref[...] = logits.astype(logits_ref.dtype)            # lane-dense store

    # predict(): softmax(dim=1) max prob + argmax(dim=1), all in f32.
    # Work in the transposed [Cpad, TB] layout (one XLU transpose, idle slot)
    # so the per-row results land directly as compact lane-major (1, TB) rows
    # -> TB*4 B contiguous writeback per output per tile.
    lt = logits.T                                                 # [Cpad, TB]
    m = jnp.max(lt, axis=0, keepdims=True)                        # [1, TB]
    e = jnp.exp(lt - m)                                           # pad cols -> 0
    denom = jnp.sum(e, axis=0, keepdims=True)                     # [1, TB]
    # max softmax prob == exp(max - max) / denom == 1 / denom  (EUP vrcp)
    max_prob = pl.reciprocal(denom, approx=True)                  # [1, TB]

    # argmax with first-occurrence tie-breaking (matches torch.argmax).
    cpad = lt.shape[0]
    cls = jax.lax.broadcasted_iota(jnp.int32, lt.shape, 0).astype(jnp.float32)
    masked = jnp.where(lt == m, cls, jnp.float32(cpad))           # non-max -> big
    pred = jnp.min(masked, axis=0, keepdims=True)                 # [1, TB]

    pred_ref[...] = pred.astype(jnp.int32)[None]                  # [1, 1, TB]
    prob_ref[...] = max_prob.astype(prob_ref.dtype)[None]         # [1, 1, TB]


def base_model_predict(x_nchw, weight, bias):
    """forward + predict of the minimal concrete BaseModel head.

    Returns (logits [B, C], predicted_classes [B], max_probabilities [B]).
    """
    B = x_nchw.shape[0]
    F = x_nchw.shape[1] * x_nchw.shape[2] * x_nchw.shape[3]
    C = weight.shape[1]
    C_pad = _round_up(C, LANE)

    # --- batch tiling --------------------------------------------------------
    # TB <= 128 (v5e MXU / VMEM friendly).  Guarantee >= 2 grid steps for
    # mid-size batches so v7x's 2 TensorCores both get work.
    B8 = _round_up(B, 8)
    TB = min(128, B8)
    if TB == B8 and B8 > 16:                 # single step but splittable
        TB = _round_up(-(-B // 2), 8)        # ceil(B/2) rounded to sublane

    # torch.flatten(x, 1).  Keep stored dtype (bf16 cast happens in-kernel);
    # no full-array pad copy — rely on Pallas partial last block, only pad a
    # handful of rows when the whole batch is smaller than one tile.
    x2d = x_nchw.reshape(B, F)
    if B < TB:
        x2d = jnp.pad(x2d, ((0, TB - B), (0, 0)))
    B_rows = max(B, TB)
    grid = pl.cdiv(B_rows, TB)

    # Weight / bias prep (small, one-time).  Padded class columns get a huge
    # negative bias so they never win max/argmax and add 0 to the softmax sum.
    w = weight.astype(jnp.bfloat16)
    if C_pad != C:
        w = jnp.pad(w, ((0, 0), (0, C_pad - C)))
    b2d = jnp.full((1, C_pad), -1e30, dtype=jnp.float32)
    b2d = b2d.at[0, :C].set(bias.astype(jnp.float32))

    # Explicit VMEM budget: double-buffered x + logits tiles, resident
    # weight/bias, compact outputs, plus 2x headroom (capped for v7x's 64 MiB).
    vmem_need = (2 * TB * F * x2d.dtype.itemsize      # x tile, double-buffered
                 + 2 * F * C_pad * 2                  # resident bf16 weight
                 + 2 * C_pad * 4                      # bias
                 + 2 * TB * C_pad * 4                 # logits tile
                 + 4 * 2 * TB * 4)                    # pred / prob tiles
    vmem_limit = int(min(64 * 2**20, max(2 * vmem_need, 16 * 2**20)))

    logits_p, pred_p, prob_p = pl.pallas_call(
        _base_model_kernel,
        out_shape=(
            jax.ShapeDtypeStruct((B_rows, C_pad), jnp.float32),
            jax.ShapeDtypeStruct((grid, 1, TB), jnp.int32),
            jax.ShapeDtypeStruct((grid, 1, TB), jnp.float32),
        ),
        grid=(grid,),
        in_specs=[
            pl.BlockSpec((TB, F), lambda i: (i, 0)),        # x tile, pipelined
            pl.BlockSpec((F, C_pad), lambda i: (0, 0)),     # weight, resident
            pl.BlockSpec((1, C_pad), lambda i: (0, 0)),     # bias, resident
        ],
        out_specs=(
            pl.BlockSpec((TB, C_pad), lambda i: (i, 0)),
            pl.BlockSpec((1, 1, TB), lambda i: (i, 0, 0)),
            pl.BlockSpec((1, 1, TB), lambda i: (i, 0, 0)),
        ),
        compiler_params=pltpu.CompilerParams(
            dimension_semantics=("parallel",),
            vmem_limit_bytes=vmem_limit),
    )(x2d, w, b2d)

    logits = logits_p[:B, :C]
    pred = pred_p.reshape(-1)[:B]
    max_prob = prob_p.reshape(-1)[:B]
    return logits, pred, max_prob


if __name__ == "__main__":
    # Small shapes consistent with an NCHW image classifier.
    B, Cin, H, W = 2, 4, 16, 16
    NUM_CLASSES = 10
    FEAT = Cin * H * W  # 1024

    key = jax.random.PRNGKey(0)
    kx, kw, kb = jax.random.split(key, 3)
    x = jax.random.normal(kx, (B, Cin, H, W), dtype=jnp.float32)
    # Deterministic "linear head" parameters (the concrete self.model).
    weight = jax.random.normal(kw, (FEAT, NUM_CLASSES), dtype=jnp.float32) * 0.02
    bias = jax.random.normal(kb, (NUM_CLASSES,), dtype=jnp.float32) * 0.01

    logits, pred, max_prob = base_model_predict(x, weight, bias)
    jax.block_until_ready((logits, pred, max_prob))

    # Plain-JAX reference with the same bf16 matmul operands (same semantics
    # as the torch module modulo the bf16 cast of the matmul inputs).
    x2d = x.reshape(B, FEAT)
    ref_logits = jnp.dot(x2d.astype(jnp.bfloat16), weight.astype(jnp.bfloat16),
                         preferred_element_type=jnp.float32) + bias
    ref_probs = jax.nn.softmax(ref_logits, axis=1)

    assert logits.shape == (B, NUM_CLASSES)
    assert pred.shape == (B,) and max_prob.shape == (B,)
    assert jnp.allclose(logits, ref_logits, atol=1e-3, rtol=1e-3)
    assert jnp.array_equal(pred, jnp.argmax(ref_logits, axis=1).astype(jnp.int32))
    assert jnp.allclose(max_prob, jnp.max(ref_probs, axis=1), atol=1e-3, rtol=1e-3)

    print("KERNEL_OK")
</pallas_src>

<mosaic_0001>
module attributes {stable_mosaic.version = 11 : i64} {
  func.func @_base_model_kernel(%arg0: i32, %arg1: memref<8x1024xf32, #tpu.memory_space<vmem>>, %arg2: memref<1024x128xbf16, #tpu.memory_space<vmem>>, %arg3: memref<1x128xf32, #tpu.memory_space<vmem>>, %arg4: memref<8x128xf32, #tpu.memory_space<vmem>>, %arg5: memref<1x1x8xi32, #tpu.memory_space<vmem>>, %arg6: memref<1x1x8xf32, #tpu.memory_space<vmem>>) attributes {dimension_semantics = [#tpu.dimension_semantics<parallel>], iteration_bounds = array<i64: 1>, scalar_prefetch = 0 : i64, scratch_operands = 0 : i64, tpu.core_type = #tpu.core_type<tc>, window_params = [{transform_indices = @transform_0, window_bounds = array<i64: 8, 1024>}, {pipeline_mode = #tpu.pipeline_mode<synchronous>, transform_indices = @transform_1, window_bounds = array<i64: 1024, 128>}, {pipeline_mode = #tpu.pipeline_mode<synchronous>, transform_indices = @transform_2, window_bounds = array<i64: 1, 128>}, {transform_indices = @transform_3, window_bounds = array<i64: 8, 128>}, {transform_indices = @transform_4, window_bounds = array<i64: 1, 1, 8>}, {transform_indices = @transform_5, window_bounds = array<i64: 1, 1, 8>}]} {
    %c0 = arith.constant 0 : index
    %c0_0 = arith.constant 0 : index
    %0 = vector.load %arg1[%c0, %c0_0] : memref<8x1024xf32, #tpu.memory_space<vmem>>, vector<8x1024xf32>
    %1 = arith.truncf %0 : vector<8x1024xf32> to vector<8x1024xbf16>
    %c0_1 = arith.constant 0 : index
    %c0_2 = arith.constant 0 : index
    %2 = vector.load %arg2[%c0_1, %c0_2] : memref<1024x128xbf16, #tpu.memory_space<vmem>>, vector<1024x128xbf16>
    %cst = arith.constant dense<0.000000e+00> : vector<8x128xf32>
    %3 = tpu.matmul %1, %2, %cst {dimension_numbers = #tpu.dot_dimension_numbers<[1], [0], [0], [1], [0, 0, 1, 1], [], []>} : vector<8x1024xbf16>, vector<1024x128xbf16>, vector<8x128xf32> -> vector<8x128xf32>
    %c0_3 = arith.constant 0 : index
    %c0_4 = arith.constant 0 : index
    %4 = vector.load %arg3[%c0_3, %c0_4] : memref<1x128xf32, #tpu.memory_space<vmem>>, vector<1x128xf32>
    %5 = vector.broadcast %4 : vector<1x128xf32> to vector<8x128xf32>
    %6 = arith.addf %3, %5 : vector<8x128xf32>
    %c0_5 = arith.constant 0 : index
    %c0_6 = arith.constant 0 : index
    %7 = vector.load %arg4[%c0_5, %c0_6] : memref<8x128xf32, #tpu.memory_space<vmem>>, vector<8x128xf32>
    tpu.vector_store %arg4[%c0_5, %c0_6], %6 {strides = array<i32>} : memref<8x128xf32, #tpu.memory_space<vmem>>, vector<8x128xf32>,
    %8 = tpu.transpose %6, [1, 0] : vector<8x128xf32> -> vector<128x8xf32>
    %cst_7 = arith.constant dense<0xFF800000> : vector<8xf32>
    %9 = vector.multi_reduction <maximumf>, %8, %cst_7 [0] : vector<128x8xf32> to vector<8xf32>
    %10 = vector.shape_cast %9 : vector<8xf32> to vector<1x8xf32>
    %11 = vector.broadcast %10 : vector<1x8xf32> to vector<128x8xf32>
    %12 = arith.subf %8, %11 : vector<128x8xf32>
    %13 = math.exp %12 : vector<128x8xf32>
    %cst_8 = arith.constant dense<0.000000e+00> : vector<8xf32>
    %14 = vector.multi_reduction <add>, %13, %cst_8 [0] : vector<128x8xf32> to vector<8xf32>
    %15 = vector.shape_cast %14 : vector<8xf32> to vector<1x8xf32>
    %16 = tpu.reciprocal %15 {approx = true} : vector<1x8xf32> -> vector<1x8xf32>
    %17 = tpu.iota {dimensions = array<i32: 0>} : vector<128x8xi32>
    %18 = arith.sitofp %17 : vector<128x8xi32> to vector<128x8xf32>
    %19 = vector.broadcast %10 : vector<1x8xf32> to vector<128x8xf32>
    %20 = arith.cmpf oeq, %8, %19 : vector<128x8xf32>
    %cst_9 = arith.constant 1.280000e+02 : f32
    %21 = vector.broadcast %cst_9 : f32 to vector<128x8xf32>
    %22 = arith.select %20, %18, %21 : vector<128x8xi1>, vector<128x8xf32>
    %cst_10 = arith.constant dense<0x7F800000> : vector<8xf32>
    %23 = vector.multi_reduction <minimumf>, %22, %cst_10 [0] : vector<128x8xf32> to vector<8xf32>
    %24 = vector.shape_cast %23 : vector<8xf32> to vector<1x8xf32>
    %25 = arith.fptosi %24 : vector<1x8xf32> to vector<1x8xi32>
    %26 = vector.shape_cast %25 : vector<1x8xi32> to vector<1x1x8xi32>
    %c0_11 = arith.constant 0 : index
    %c0_12 = arith.constant 0 : index
    %c0_13 = arith.constant 0 : index
    %27 = vector.load %arg5[%c0_11, %c0_12, %c0_13] : memref<1x1x8xi32, #tpu.memory_space<vmem>>, vector<1x1x8xi32>
    tpu.vector_store %arg5[%c0_11, %c0_12, %c0_13], %26 {strides = array<i32>} : memref<1x1x8xi32, #tpu.memory_space<vmem>>, vector<1x1x8xi32>,
    %28 = vector.shape_cast %16 : vector<1x8xf32> to vector<1x1x8xf32>
    %c0_14 = arith.constant 0 : index
    %c0_15 = arith.constant 0 : index
    %c0_16 = arith.constant 0 : index
    %29 = vector.load %arg6[%c0_14, %c0_15, %c0_16] : memref<1x1x8xf32, #tpu.memory_space<vmem>>, vector<1x1x8xf32>
    tpu.vector_store %arg6[%c0_14, %c0_15, %c0_16], %28 {strides = array<i32>} : memref<1x1x8xf32, #tpu.memory_space<vmem>>, vector<1x1x8xf32>,
    return
  }
  func.func @transform_0(%arg0: i32) -> (i32, i32) {
    %c0_i32 = arith.constant 0 : i32
    %c0_i32_0 = arith.constant 0 : i32
    return %arg0, %c0_i32 : i32, i32
  }
  func.func @transform_1(%arg0: i32) -> (i32, i32) {
    %c0_i32 = arith.constant 0 : i32
    %c0_i32_0 = arith.constant 0 : i32
    %c0_i32_1 = arith.constant 0 : i32
    return %c0_i32, %c0_i32_0 : i32, i32
  }
  func.func @transform_2(%arg0: i32) -> (i32, i32) {
    %c0_i32 = arith.constant 0 : i32
    %c0_i32_0 = arith.constant 0 : i32
    %c0_i32_1 = arith.constant 0 : i32
    return %c0_i32, %c0_i32_0 : i32, i32
  }
  func.func @transform_3(%arg0: i32) -> (i32, i32) {
    %c0_i32 = arith.constant 0 : i32
    %c0_i32_0 = arith.constant 0 : i32
    return %arg0, %c0_i32 : i32, i32
  }
  func.func @transform_4(%arg0: i32) -> (i32, i32, i32) {
    %c0_i32 = arith.constant 0 : i32
    %c0_i32_0 = arith.constant 0 : i32
    %c0_i32_1 = arith.constant 0 : i32
    return %arg0, %c0_i32, %c0_i32_0 : i32, i32, i32
  }
  func.func @transform_5(%arg0: i32) -> (i32, i32, i32) {
    %c0_i32 = arith.constant 0 : i32
    %c0_i32_0 = arith.constant 0 : i32
    %c0_i32_1 = arith.constant 0 : i32
    return %arg0, %c0_i32, %c0_i32_0 : i32, i32, i32
  }
}

</mosaic_0001>

<llo_original>
// kernel: tpu_custom_call.1
$region0: #{tpu_custom_call.1}
  #allocation0 [shape = 'u32[]', space=smem, size = 0x4, offset = 0x4, fixed_abs, tag = 'smem constant byte address 0x4 - core index']
  #allocation1 [shape = 'u32[144,128]{1,0:T(1,128)}', space=vmem, size = 0x12000, scoped, tag = 'internal scratch']
  %s0 = inlined_call_operand.hbm [shape: f32[8,1024], index: 0, kind: input, shape index: {}]
  %s1 = inlined_call_operand.hbm [shape: bf16[1024,128], index: 1, kind: input, shape index: {}]
  %s2 = inlined_call_operand.vmem [shape: f32[1,128], index: 2, kind: input, shape index: {}]
  %s3 = inlined_call_operand.hbm [shape: f32[8,128], index: 3, kind: output, shape index: {0}]
  %s4 = inlined_call_operand.hbm [shape: s32[1,1,8], index: 4, kind: output, shape index: {1}]
  %s5 = inlined_call_operand.hbm [shape: f32[1,1,8], index: 5, kind: output, shape index: {2}]
  %6 = xla_tuple %s3, %s4, %s5
  %s7 = sld [smem:[#allocation0]]
  $region46: #{tpu_custom_call.1} parent=0
    _
  %s9 = ssub.s32 1, %s7
  %s10 = scalar_select 0, %s9, %s7
  $region1: #{tpu_custom_call.1} parent=0
    #allocation2 [shape = 'u8[32768]{0}', space=vmem, size = 0x8000, scoped, tag = 'input window, operand 0, single buffered']
    #allocation3 [shape = 's32[1]{0}', space=sflag, size = 0x4, scoped, tag = 'scoped memory for tpu_custom_call.1']
    #allocation4 [shape = 's32[1]{0}', space=sflag, size = 0x4, scoped, tag = 'scoped memory for tpu_custom_call.1']
    #allocation5 [shape = 'u8[262144]{0}', space=vmem, size = 0x40000, scoped, tag = 'input window, operand 1, single buffered']
    #allocation6 [shape = 's32[1]{0}', space=sflag, size = 0x4, scoped, tag = 'scoped memory for tpu_custom_call.1']
    #allocation7 [shape = 'u8[4096]{0}', space=vmem, size = 0x1000, scoped, tag = 'output window, operand 0, single buffered']
    #allocation8 [shape = 'u8[512]{0}', space=vmem, size = 0x400, scoped, tag = 'output window, operand 1, single buffered']
    #allocation9 [shape = 's32[1]{0}', space=sflag, size = 0x4, scoped, tag = 'scoped memory for tpu_custom_call.1']
    #allocation10 [shape = 'u8[512]{0}', space=vmem, size = 0x400, scoped, tag = 'output window, operand 2, single buffered']
    %11 = vsyncpa [#allocation3], 0
    %12 = vsyncpa [#allocation6], 0
    %13 = vsyncpa [#allocation4], 0
    %14 = vsyncpa [#allocation9], 0
    // Predicated region
    $region2: #{tpu_custom_call.1} parent=1 // pred_check
      _
    $region3: #{tpu_custom_call.1} parent=1 // pred_check_branch
      %16 = sbr.rel (0) target = $region5
    $region4: #{tpu_custom_call.1} parent=1 // pred_region
      %s18 = ssub.s32 1024, 1024
      %19 = vsyncadd [#allocation3], %s18
      %s21 = sshll.u32 [#allocation2], 4
      %s22 = int_to_ptr.vmem [resolvable:$true] %s21
      %24 = dma.hbm_to_vmem [thread:$0]  %s0, 1024, %s22, [#allocation3]
    $region5: #{tpu_custom_call.1} parent=1 // pred_fallthru
      _
    // Predicated region
    $region6: #{tpu_custom_call.1} parent=1 // pred_check
      _
    $region7: #{tpu_custom_call.1} parent=1 // pred_check_branch
      %26 = sbr.rel (0) target = $region9
    $region8: #{tpu_custom_call.1} parent=1 // pred_region
      %s28 = ssub.s32 8192, 8192
      %29 = vsyncadd [#allocation6], %s28
      %s30 = sshll.u32 [#allocation5], 4
      %s31 = int_to_ptr.vmem [resolvable:$true] %s30
      %36 = dma.hbm_to_vmem [thread:$0]  %s1, 8192, %s31, [#allocation6], 64, 64, 4
    $region9: #{tpu_custom_call.1} parent=1 // pred_fallthru
      _
    // Predicated region
    $region10: #{tpu_custom_call.1} parent=1 // pred_check
      _
    $region11: #{tpu_custom_call.1} parent=1 // pred_check_branch
      %38 = sbr.rel (0) target = $region13
    $region12: #{tpu_custom_call.1} parent=1 // pred_region
      _
    $region13: #{tpu_custom_call.1} parent=1 // pred_fallthru
      _
    // Predicated region
    $region14: #{tpu_custom_call.1} parent=1 // pred_check
      _
    $region15: #{tpu_custom_call.1} parent=1 // pred_check_branch
      %40 = sbr.rel (0) target = $region17
    $region16: #{tpu_custom_call.1} parent=1 // pred_region
      %41 = dma.done [#allocation3], 1024
    $region17: #{tpu_custom_call.1} parent=1 // pred_fallthru
      _
    // Predicated region
    $region18: #{tpu_custom_call.1} parent=1 // pred_check
      _
    $region19: #{tpu_custom_call.1} parent=1 // pred_check_branch
      %43 = sbr.rel (0) target = $region21
    $region20: #{tpu_custom_call.1} parent=1 // pred_region
      %44 = dma.done [#allocation6], 8192
    $region21: #{tpu_custom_call.1} parent=1 // pred_fallthru
      _
    %v46 = vld [vmem:[#allocation2] sm:$0xff]
    %v47 = vld [vmem:[#allocation2 + $0x8] sm:$0xff]
    %v48 = vld [vmem:[#allocation2 + $0x10] sm:$0xff]
    %v49 = vld [vmem:[#allocation2 + $0x18] sm:$0xff]
    %v50 = vld [vmem:[#allocation2 + $0x20] sm:$0xff]
    %v51 = vld [vmem:[#allocation2 + $0x28] sm:$0xff]
    %v52 = vld [vmem:[#allocation2 + $0x30] sm:$0xff]
    %v53 = vld [vmem:[#allocation2 + $0x38] sm:$0xff]
    %v54 = vpack.c.bf16 %v46, %v46
    %v55 = vpack.c.bf16 %v47, %v47
    %v56 = vpack.c.bf16 %v48, %v48
    %v57 = vpack.c.bf16 %v49, %v49
    %v58 = vpack.c.bf16 %v50, %v50
    %v59 = vpack.c.bf16 %v51, %v51
    %v60 = vpack.c.bf16 %v52, %v52
    %v61 = vpack.c.bf16 %v53, %v53
    %v62 = vld [vmem:[#allocation5] sm:$0xf]
    %v63 = vld [vmem:[#allocation5 + $0x4] sm:$0xf]
    %v64 = vld [vmem:[#allocation5 + $0x8] sm:$0xf]
    %v65 = vld [vmem:[#allocation5 + $0xc] sm:$0xf]
    %v66 = vld [vmem:[#allocation5 + $0x10] sm:$0xf]
    %v67 = vld [vmem:[#allocation5 + $0x14] sm:$0xf]
    %v68 = vld [vmem:[#allocation5 + $0x18] sm:$0xf]
    %v69 = vld [vmem:[#allocation5 + $0x1c] sm:$0xf]
    %v70 = vld [vmem:[#allocation5 + $0x20] sm:$0xf]
    %v71 = vld [vmem:[#allocation5 + $0x24] sm:$0xf]
    %v72 = vld [vmem:[#allocation5 + $0x28] sm:$0xf]
    %v73 = vld [vmem:[#allocation5 + $0x2c] sm:$0xf]
    %v74 = vld [vmem:[#allocation5 + $0x30] sm:$0xf]
    %v75 = vld [vmem:[#allocation5 + $0x34] sm:$0xf]
    %v76 = vld [vmem:[#allocation5 + $0x38] sm:$0xf]
    %v77 = vld [vmem:[#allocation5 + $0x3c] sm:$0xf]
    %v78 = vld [vmem:[#allocation5 + $0x40] sm:$0xf]
    %v79 = vld [vmem:[#allocation5 + $0x44] sm:$0xf]
    %v80 = vld [vmem:[#allocation5 + $0x48] sm:$0xf]
    %v81 = vld [vmem:[#allocation5 + $0x4c] sm:$0xf]
    %v82 = vld [vmem:[#allocation5 + $0x50] sm:$0xf]
    %v83 = vld [vmem:[#allocation5 + $0x54] sm:$0xf]
    %v84 = vld [vmem:[#allocation5 + $0x58] sm:$0xf]
    %v85 = vld [vmem:[#allocation5 + $0x5c] sm:$0xf]
    %v86 = vld [vmem:[#allocation5 + $0x60] sm:$0xf]
    %v87 = vld [vmem:[#allocation5 + $0x64] sm:$0xf]
    %v88 = vld [vmem:[#allocation5 + $0x68] sm:$0xf]
    %v89 = vld [vmem:[#allocation5 + $0x6c] sm:$0xf]
    %v90 = vld [vmem:[#allocation5 + $0x70] sm:$0xf]
    %v91 = vld [vmem:[#allocation5 + $0x74] sm:$0xf]
    %v92 = vld [vmem:[#allocation5 + $0x78] sm:$0xf]
    %v93 = vld [vmem:[#allocation5 + $0x7c] sm:$0xf]
    %v94 = vld [vmem:[#allocation5 + $0x80] sm:$0xf]
    %v95 = vld [vmem:[#allocation5 + $0x84] sm:$0xf]
    %v96 = vld [vmem:[#allocation5 + $0x88] sm:$0xf]
    %v97 = vld [vmem:[#allocation5 + $0x8c] sm:$0xf]
    %v98 = vld [vmem:[#allocation5 + $0x90] sm:$0xf]
    %v99 = vld [vmem:[#allocation5 + $0x94] sm:$0xf]
    %v100 = vld [vmem:[#allocation5 + $0x98] sm:$0xf]
    %v101 = vld [vmem:[#allocation5 + $0x9c] sm:$0xf]
    %v102 = vld [vmem:[#allocation5 + $0xa0] sm:$0xf]
    %v103 = vld [vmem:[#allocation5 + $0xa4] sm:$0xf]
    %v104 = vld [vmem:[#allocation5 + $0xa8] sm:$0xf]
    %v105 = vld [vmem:[#allocation5 + $0xac] sm:$0xf]
    %v106 = vld [vmem:[#allocation5 + $0xb0] sm:$0xf]
    %v107 = vld [vmem:[#allocation5 + $0xb4] sm:$0xf]
    %v108 = vld [vmem:[#allocation5 + $0xb8] sm:$0xf]
    %v109 = vld [vmem:[#allocation5 + $0xbc] sm:$0xf]
    %v110 = vld [vmem:[#allocation5 + $0xc0] sm:$0xf]
    %v111 = vld [vmem:[#allocation5 + $0xc4] sm:$0xf]
    %v112 = vld [vmem:[#allocation5 + $0xc8] sm:$0xf]
    %v113 = vld [vmem:[#allocation5 + $0xcc] sm:$0xf]
    %v114 = vld [vmem:[#allocation5 + $0xd0] sm:$0xf]
    %v115 = vld [vmem:[#allocation5 + $0xd4] sm:$0xf]
    %v116 = vld [vmem:[#allocation5 + $0xd8] sm:$0xf]
    %v117 = vld [vmem:[#allocation5 + $0xdc] sm:$0xf]
    %v118 = vld [vmem:[#allocation5 + $0xe0] sm:$0xf]
    %v119 = vld [vmem:[#allocation5 + $0xe4] sm:$0xf]
    %v120 = vld [vmem:[#allocation5 + $0xe8] sm:$0xf]
    %v121 = vld [vmem:[#allocation5 + $0xec] sm:$0xf]
    %v122 = vld [vmem:[#allocation5 + $0xf0] sm:$0xf]
    %v123 = vld [vmem:[#allocation5 + $0xf4] sm:$0xf]
    %v124 = vld [vmem:[#allocation5 + $0xf8] sm:$0xf]
    %v125 = vld [vmem:[#allocation5 + $0xfc] sm:$0xf]
    %v126 = vld [vmem:[#allocation5 + $0x100] sm:$0xf]
    %v127 = vld [vmem:[#allocation5 + $0x104] sm:$0xf]
    %v128 = vld [vmem:[#allocation5 + $0x108] sm:$0xf]
    %v129 = vld [vmem:[#allocation5 + $0x10c] sm:$0xf]
    %v130 = vld [vmem:[#allocation5 + $0x110] sm:$0xf]
    %v131 = vld [vmem:[#allocation5 + $0x114] sm:$0xf]
    %v132 = vld [vmem:[#allocation5 + $0x118] sm:$0xf]
    %v133 = vld [vmem:[#allocation5 + $0x11c] sm:$0xf]
    %v134 = vld [vmem:[#allocation5 + $0x120] sm:$0xf]
    %v135 = vld [vmem:[#allocation5 + $0x124] sm:$0xf]
    %v136 = vld [vmem:[#allocation5 + $0x128] sm:$0xf]
    %v137 = vld [vmem:[#allocation5 + $0x12c] sm:$0xf]
    %v138 = vld [vmem:[#allocation5 + $0x130] sm:$0xf]
    %v139 = vld [vmem:[#allocation5 + $0x134] sm:$0xf]
    %v140 = vld [vmem:[#allocation5 + $0x138] sm:$0xf]
    %v141 = vld [vmem:[#allocation5 + $0x13c] sm:$0xf]
    %v142 = vld [vmem:[#allocation5 + $0x140] sm:$0xf]
    %v143 = vld [vmem:[#allocation5 + $0x144] sm:$0xf]
    %v144 = vld [vmem:[#allocation5 + $0x148] sm:$0xf]
    %v145 = vld [vmem:[#allocation5 + $0x14c] sm:$0xf]
    %v146 = vld [vmem:[#allocation5 + $0x150] sm:$0xf]
    %v147 = vld [vmem:[#allocation5 + $0x154] sm:$0xf]
    %v148 = vld [vmem:[#allocation5 + $0x158] sm:$0xf]
    %v149 = vld [vmem:[#allocation5 + $0x15c] sm:$0xf]
    %v150 = vld [vmem:[#allocation5 + $0x160] sm:$0xf]
    %v151 = vld [vmem:[#allocation5 + $0x164] sm:$0xf]
    %v152 = vld [vmem:[#allocation5 + $0x168] sm:$0xf]
    %v153 = vld [vmem:[#allocation5 + $0x16c] sm:$0xf]
    %v154 = vld [vmem:[#allocation5 + $0x170] sm:$0xf]
    %v155 = vld [vmem:[#allocation5 + $0x174] sm:$0xf]
    %v156 = vld [vmem:[#allocation5 + $0x178] sm:$0xf]
    %v157 = vld [vmem:[#allocation5 + $0x17c] sm:$0xf]
    %v158 = vld [vmem:[#allocation5 + $0x180] sm:$0xf]
    %v159 = vld [vmem:[#allocation5 + $0x184] sm:$0xf]
    %v160 = vld [vmem:[#allocation5 + $0x188] sm:$0xf]
    %v161 = vld [vmem:[#allocation5 + $0x18c] sm:$0xf]
    %v162 = vld [vmem:[#allocation5 + $0x190] sm:$0xf]
    %v163 = vld [vmem:[#allocation5 + $0x194] sm:$0xf]
    %v164 = vld [vmem:[#allocation5 + $0x198] sm:$0xf]
    %v165 = vld [vmem:[#allocation5 + $0x19c] sm:$0xf]
    %v166 = vld [vmem:[#allocation5 + $0x1a0] sm:$0xf]
    %v167 = vld [vmem:[#allocation5 + $0x1a4] sm:$0xf]
    %v168 = vld [vmem:[#allocation5 + $0x1a8] sm:$0xf]
    %v169 = vld [vmem:[#allocation5 + $0x1ac] sm:$0xf]
    %v170 = vld [vmem:[#allocation5 + $0x1b0] sm:$0xf]
    %v171 = vld [vmem:[#allocation5 + $0x1b4] sm:$0xf]
    %v172 = vld [vmem:[#allocation5 + $0x1b8] sm:$0xf]
    %v173 = vld [vmem:[#allocation5 + $0x1bc] sm:$0xf]
    %v174 = vld [vmem:[#allocation5 + $0x1c0] sm:$0xf]
    %v175 = vld [vmem:[#allocation5 + $0x1c4] sm:$0xf]
    %v176 = vld [vmem:[#allocation5 + $0x1c8] sm:$0xf]
    %v177 = vld [vmem:[#allocation5 + $0x1cc] sm:$0xf]
    %v178 = vld [vmem:[#allocation5 + $0x1d0] sm:$0xf]
    %v179 = vld [vmem:[#allocation5 + $0x1d4] sm:$0xf]
    %v180 = vld [vmem:[#allocation5 + $0x1d8] sm:$0xf]
    %v181 = vld [vmem:[#allocation5 + $0x1dc] sm:$0xf]
    %v182 = vld [vmem:[#allocation5 + $0x1e0] sm:$0xf]
    %v183 = vld [vmem:[#allocation5 + $0x1e4] sm:$0xf]
    %v184 = vld [vmem:[#allocation5 + $0x1e8] sm:$0xf]
    %v185 = vld [vmem:[#allocation5 + $0x1ec] sm:$0xf]
    %v186 = vld [vmem:[#allocation5 + $0x1f0] sm:$0xf]
    %v187 = vld [vmem:[#allocation5 + $0x1f4] sm:$0xf]
    %v188 = vld [vmem:[#allocation5 + $0x1f8] sm:$0xf]
    %v189 = vld [vmem:[#allocation5 + $0x1fc] sm:$0xf]
    %v190 = vld [vmem:[%s2] sm:$0x1]
    %v192 = vlaneseq
    %v193 = vshrl.u32 %v192, 7
    %v194 = vsub.s32 0, %v193
    %v195 = vrot.slane %v190, %v194
    %v325 = vunpack.c.l.b16 %v62
    %v326 = vunpack.c.l.b16 %v63
    %v327 = vunpack.c.l.b16 %v64
    %v328 = vunpack.c.l.b16 %v65
    %v329 = vunpack.c.l.b16 %v66
    %v330 = vunpack.c.l.b16 %v67
    %v331 = vunpack.c.l.b16 %v68
    %v332 = vunpack.c.l.b16 %v69
    %v333 = vunpack.c.l.b16 %v70
    %v334 = vunpack.c.l.b16 %v71
    %v335 = vunpack.c.l.b16 %v72
    %v336 = vunpack.c.l.b16 %v73
    %v337 = vunpack.c.l.b16 %v74
    %v338 = vunpack.c.l.b16 %v75
    %v339 = vunpack.c.l.b16 %v76
    %v340 = vunpack.c.l.b16 %v77
    %v341 = vunpack.c.l.b16 %v78
    %v342 = vunpack.c.l.b16 %v79
    %v343 = vunpack.c.l.b16 %v80
    %v344 = vunpack.c.l.b16 %v81
    %v345 = vunpack.c.l.b16 %v82
    %v346 = vunpack.c.l.b16 %v83
    %v347 = vunpack.c.l.b16 %v84
    %v348 = vunpack.c.l.b16 %v85
    %v349 = vunpack.c.l.b16 %v86
    %v350 = vunpack.c.l.b16 %v87
    %v351 = vunpack.c.l.b16 %v88
    %v352 = vunpack.c.l.b16 %v89
    %v353 = vunpack.c.l.b16 %v90
    %v354 = vunpack.c.l.b16 %v91
    %v355 = vunpack.c.l.b16 %v92
    %v356 = vunpack.c.l.b16 %v93
    %v357 = vunpack.c.l.b16 %v94
    %v358 = vunpack.c.l.b16 %v95
    %v359 = vunpack.c.l.b16 %v96
    %v360 = vunpack.c.l.b16 %v97
    %v361 = vunpack.c.l.b16 %v98
    %v362 = vunpack.c.l.b16 %v99
    %v363 = vunpack.c.l.b16 %v100
    %v364 = vunpack.c.l.b16 %v101
    %v365 = vunpack.c.l.b16 %v102
    %v366 = vunpack.c.l.b16 %v103
    %v367 = vunpack.c.l.b16 %v104
    %v368 = vunpack.c.l.b16 %v105
    %v369 = vunpack.c.l.b16 %v106
    %v370 = vunpack.c.l.b16 %v107
    %v371 = vunpack.c.l.b16 %v108
    %v372 = vunpack.c.l.b16 %v109
    %v373 = vunpack.c.l.b16 %v110
    %v374 = vunpack.c.l.b16 %v111
    %v375 = vunpack.c.l.b16 %v112
    %v376 = vunpack.c.l.b16 %v113
    %v377 = vunpack.c.l.b16 %v114
    %v378 = vunpack.c.l.b16 %v115
    %v379 = vunpack.c.l.b16 %v116
    %v380 = vunpack.c.l.b16 %v117
    %v381 = vunpack.c.l.b16 %v118
    %v382 = vunpack.c.l.b16 %v119
    %v383 = vunpack.c.l.b16 %v120
    %v384 = vunpack.c.l.b16 %v121
    %v385 = vunpack.c.l.b16 %v122
    %v386 = vunpack.c.l.b16 %v123
    %v387 = vunpack.c.l.b16 %v124
    %v388 = vunpack.c.l.b16 %v125
    %v389 = vunpack.c.l.b16 %v126
    %v390 = vunpack.c.l.b16 %v127
    %v391 = vunpack.c.l.b16 %v128
    %v392 = vunpack.c.l.b16 %v129
    %v393 = vunpack.c.l.b16 %v130
    %v394 = vunpack.c.l.b16 %v131
    %v395 = vunpack.c.l.b16 %v132
    %v396 = vunpack.c.l.b16 %v133
    %v397 = vunpack.c.l.b16 %v134
    %v398 = vunpack.c.l.b16 %v135
    %v399 = vunpack.c.l.b16 %v136
    %v400 = vunpack.c.l.b16 %v137
    %v401 = vunpack.c.l.b16 %v138
    %v402 = vunpack.c.l.b16 %v139
    %v403 = vunpack.c.l.b16 %v140
    %v404 = vunpack.c.l.b16 %v141
    %v405 = vunpack.c.l.b16 %v142
    %v406 = vunpack.c.l.b16 %v143
    %v407 = vunpack.c.l.b16 %v144
    %v408 = vunpack.c.l.b16 %v145
    %v409 = vunpack.c.l.b16 %v146
    %v410 = vunpack.c.l.b16 %v147
    %v411 = vunpack.c.l.b16 %v148
    %v412 = vunpack.c.l.b16 %v149
    %v413 = vunpack.c.l.b16 %v150
    %v414 = vunpack.c.l.b16 %v151
    %v415 = vunpack.c.l.b16 %v152
    %v416 = vunpack.c.l.b16 %v153
    %v417 = vunpack.c.l.b16 %v154
    %v418 = vunpack.c.l.b16 %v155
    %v419 = vunpack.c.l.b16 %v156
    %v420 = vunpack.c.l.b16 %v157
    %v421 = vunpack.c.l.b16 %v158
    %v422 = vunpack.c.l.b16 %v159
    %v423 = vunpack.c.l.b16 %v160
    %v424 = vunpack.c.l.b16 %v161
    %v425 = vunpack.c.l.b16 %v162
    %v426 = vunpack.c.l.b16 %v163
    %v427 = vunpack.c.l.b16 %v164
    %v428 = vunpack.c.l.b16 %v165
    %v429 = vunpack.c.l.b16 %v166
    %v430 = vunpack.c.l.b16 %v167
    %v431 = vunpack.c.l.b16 %v168
    %v432 = vunpack.c.l.b16 %v169
    %v433 = vunpack.c.l.b16 %v170
    %v434 = vunpack.c.l.b16 %v171
    %v435 = vunpack.c.l.b16 %v172
    %v436 = vunpack.c.l.b16 %v173
    %v437 = vunpack.c.l.b16 %v174
    %v438 = vunpack.c.l.b16 %v175
    %v439 = vunpack.c.l.b16 %v176
    %v440 = vunpack.c.l.b16 %v177
    %v441 = vunpack.c.l.b16 %v178
    %v442 = vunpack.c.l.b16 %v179
    %v443 = vunpack.c.l.b16 %v180
    %v444 = vunpack.c.l.b16 %v181
    %v445 = vunpack.c.l.b16 %v182
    %v446 = vunpack.c.l.b16 %v183
    %v447 = vunpack.c.l.b16 %v184
    %v448 = vunpack.c.l.b16 %v185
    %v449 = vunpack.c.l.b16 %v186
    %v450 = vunpack.c.l.b16 %v187
    %v451 = vunpack.c.l.b16 %v188
    %v452 = vunpack.c.l.b16 %v189
    %v453 = vpack.c.b16 %v326, %v325
    %v454 = vpack.c.b16 %v328, %v327
    %v455 = vpack.c.b16 %v330, %v329
    %v456 = vpack.c.b16 %v332, %v331
    %v457 = vpack.c.b16 %v334, %v333
    %v458 = vpack.c.b16 %v336, %v335
    %v459 = vpack.c.b16 %v338, %v337
    %v460 = vpack.c.b16 %v340, %v339
    %v461 = vpack.c.b16 %v342, %v341
    %v462 = vpack.c.b16 %v344, %v343
    %v463 = vpack.c.b16 %v346, %v345
    %v464 = vpack.c.b16 %v348, %v347
    %v465 = vpack.c.b16 %v350, %v349
    %v466 = vpack.c.b16 %v352, %v351
    %v467 = vpack.c.b16 %v354, %v353
    %v468 = vpack.c.b16 %v356, %v355
    %v469 = vpack.c.b16 %v358, %v357
    %v470 = vpack.c.b16 %v360, %v359
    %v471 = vpack.c.b16 %v362, %v361
    %v472 = vpack.c.b16 %v364, %v363
    %v473 = vpack.c.b16 %v366, %v365
    %v474 = vpack.c.b16 %v368, %v367
    %v475 = vpack.c.b16 %v370, %v369
    %v476 = vpack.c.b16 %v372, %v371
    %v477 = vpack.c.b16 %v374, %v373
    %v478 = vpack.c.b16 %v376, %v375
    %v479 = vpack.c.b16 %v378, %v377
    %v480 = vpack.c.b16 %v380, %v379
    %v481 = vpack.c.b16 %v382, %v381
    %v482 = vpack.c.b16 %v384, %v383
    %v483 = vpack.c.b16 %v386, %v385
    %v484 = vpack.c.b16 %v388, %v387
    %v485 = vpack.c.b16 %v390, %v389
    %v486 = vpack.c.b16 %v392, %v391
    %v487 = vpack.c.b16 %v394, %v393
    %v488 = vpack.c.b16 %v396, %v395
    %v489 = vpack.c.b16 %v398, %v397
    %v490 = vpack.c.b16 %v400, %v399
    %v491 = vpack.c.b16 %v402, %v401
    %v492 = vpack.c.b16 %v404, %v403
    %v493 = vpack.c.b16 %v406, %v405
    %v494 = vpack.c.b16 %v408, %v407
    %v495 = vpack.c.b16 %v410, %v409
    %v496 = vpack.c.b16 %v412, %v411
    %v497 = vpack.c.b16 %v414, %v413
    %v498 = vpack.c.b16 %v416, %v415
    %v499 = vpack.c.b16 %v418, %v417
    %v500 = vpack.c.b16 %v420, %v419
    %v501 = vpack.c.b16 %v422, %v421
    %v502 = vpack.c.b16 %v424, %v423
    %v503 = vpack.c.b16 %v426, %v425
    %v504 = vpack.c.b16 %v428, %v427
    %v505 = vpack.c.b16 %v430, %v429
    %v506 = vpack.c.b16 %v432, %v431
    %v507 = vpack.c.b16 %v434, %v433
    %v508 = vpack.c.b16 %v436, %v435
    %v509 = vpack.c.b16 %v438, %v437
    %v510 = vpack.c.b16 %v440, %v439
    %v511 = vpack.c.b16 %v442, %v441
    %v512 = vpack.c.b16 %v444, %v443
    %v513 = vpack.c.b16 %v446, %v445
    %v514 = vpack.c.b16 %v448, %v447
    %v515 = vpack.c.b16 %v450, %v449
    %v516 = vpack.c.b16 %v452, %v451
    %581 = vmatprep.subr.bf16.mxu0 0
    %582 = vmatpush1.bf16.msra.mxu0 %v453
    %583 = vmatprep.subr.bf16.mxu0 0
    %584 = vmatpush1.bf16.msra.mxu0 %v454
    %585 = vmatprep.subr.bf16.mxu0 0
    %586 = vmatpush1.bf16.msra.mxu0 %v455
    %587 = vmatprep.subr.bf16.mxu0 0
    %588 = vmatpush1.bf16.msra.mxu0 %v456
    %589 = vmatprep.subr.bf16.mxu0 0
    %590 = vmatpush1.bf16.msra.mxu0 %v457
    %591 = vmatprep.subr.bf16.mxu0 0
    %592 = vmatpush1.bf16.msra.mxu0 %v458
    %593 = vmatprep.subr.bf16.mxu0 0
    %594 = vmatpush1.bf16.msra.mxu0 %v459
    %595 = vmatprep.subr.bf16.mxu0 0
    %596 = vmatpush1.bf16.msra.mxu0 %v460
    %597 = vmatprep.subr.bf16.mxu0 0
    %598 = vmatpush1.bf16.msra.mxu0 %v461
    %599 = vmatprep.subr.bf16.mxu0 0
    %600 = vmatpush1.bf16.msra.mxu0 %v462
    %601 = vmatprep.subr.bf16.mxu0 0
    %602 = vmatpush1.bf16.msra.mxu0 %v463
    %603 = vmatprep.subr.bf16.mxu0 0
    %604 = vmatpush1.bf16.msra.mxu0 %v464
    %605 = vmatprep.subr.bf16.mxu0 0
    %606 = vmatpush1.bf16.msra.mxu0 %v465
    %607 = vmatprep.subr.bf16.mxu0 0
    %608 = vmatpush1.bf16.msra.mxu0 %v466
    %609 = vmatprep.subr.bf16.mxu0 0
    %610 = vmatpush1.bf16.msra.mxu0 %v467
    %611 = vmatprep.subr.bf16.mxu0 0
    %612 = vmatpush1.bf16.msra.mxu0 %v468
    %613 = vmatprep.mubr.bf16.mxu0 %v55
    %614 = vmatmul.mubr.bf16.gmra.mrb[0].mxu0 %v54
    %v615 = vpop.f32.mrb[0].mxu0
    %v616 = vadd.f32 %v195, %v615
    %v617 = vpop.f32.mrb[0].mxu0
    %v618 = vpop.f32.mrb[0].mxu0
    %v619 = vpop.f32.mrb[0].mxu0
    %620 = vdwg.mxu0
    %621 = vmatprep.subr.bf16.mxu0 0
    %622 = vmatpush1.bf16.msra.mxu0 %v469
    %623 = vmatprep.subr.bf16.mxu0 0
    %624 = vmatpush1.bf16.msra.mxu0 %v470
    %625 = vmatprep.subr.bf16.mxu0 0
    %626 = vmatpush1.bf16.msra.mxu0 %v471
    %627 = vmatprep.subr.bf16.mxu0 0
    %628 = vmatpush1.bf16.msra.mxu0 %v472
    %629 = vmatprep.subr.bf16.mxu0 0
    %630 = vmatpush1.bf16.msra.mxu0 %v473
    %631 = vmatprep.subr.bf16.mxu0 0
    %632 = vmatpush1.bf16.msra.mxu0 %v474
    %633 = vmatprep.subr.bf16.mxu0 0
    %634 = vmatpush1.bf16.msra.mxu0 %v475
    %635 = vmatprep.subr.bf16.mxu0 0
    %636 = vmatpush1.bf16.msra.mxu0 %v476
    %637 = vmatprep.subr.bf16.mxu0 0
    %638 = vmatpush1.bf16.msra.mxu0 %v477
    %639 = vmatprep.subr.bf16.mxu0 0
    %640 = vmatpush1.bf16.msra.mxu0 %v478
    %641 = vmatprep.subr.bf16.mxu0 0
    %642 = vmatpush1.bf16.msra.mxu0 %v479
    %643 = vmatprep.subr.bf16.mxu0 0
    %644 = vmatpush1.bf16.msra.mxu0 %v480
    %645 = vmatprep.subr.bf16.mxu0 0
    %646 = vmatpush1.bf16.msra.mxu0 %v481
    %647 = vmatprep.subr.bf16.mxu0 0
    %648 = vmatpush1.bf16.msra.mxu0 %v482
    %649 = vmatprep.subr.bf16.mxu0 0
    %650 = vmatpush1.bf16.msra.mxu0 %v483
    %651 = vmatprep.subr.bf16.mxu0 0
    %652 = vmatpush1.bf16.msra.mxu0 %v484
    %653 = vmatprep.mubr.bf16.mxu0 %v57
    %654 = vmatmul.mubr.bf16.gmra.mrb[0].mxu0 %v56
    %v655 = vpop.f32.mrb[0].mxu0
    %v656 = vadd.f32 %v616, %v655
    %v657 = vpop.f32.mrb[0].mxu0
    %v658 = vpop.f32.mrb[0].mxu0
    %v659 = vpop.f32.mrb[0].mxu0
    %660 = vdwg.mxu0
    %661 = vmatprep.subr.bf16.mxu0 0
    %662 = vmatpush1.bf16.msra.mxu0 %v485
    %663 = vmatprep.subr.bf16.mxu0 0
    %664 = vmatpush1.bf16.msra.mxu0 %v486
    %665 = vmatprep.subr.bf16.mxu0 0
    %666 = vmatpush1.bf16.msra.mxu0 %v487
    %667 = vmatprep.subr.bf16.mxu0 0
    %668 = vmatpush1.bf16.msra.mxu0 %v488
    %669 = vmatprep.subr.bf16.mxu0 0
    %670 = vmatpush1.bf16.msra.mxu0 %v489
    %671 = vmatprep.subr.bf16.mxu0 0
    %672 = vmatpush1.bf16.msra.mxu0 %v490
    %673 = vmatprep.subr.bf16.mxu0 0
    %674 = vmatpush1.bf16.msra.mxu0 %v491
    %675 = vmatprep.subr.bf16.mxu0 0
    %676 = vmatpush1.bf16.msra.mxu0 %v492
    %677 = vmatprep.subr.bf16.mxu0 0
    %678 = vmatpush1.bf16.msra.mxu0 %v493
    %679 = vmatprep.subr.bf16.mxu0 0
    %680 = vmatpush1.bf16.msra.mxu0 %v494
    %681 = vmatprep.subr.bf16.mxu0 0
    %682 = vmatpush1.bf16.msra.mxu0 %v495
    %683 = vmatprep.subr.bf16.mxu0 0
    %684 = vmatpush1.bf16.msra.mxu0 %v496
    %685 = vmatprep.subr.bf16.mxu0 0
    %686 = vmatpush1.bf16.msra.mxu0 %v497
    %687 = vmatprep.subr.bf16.mxu0 0
    %688 = vmatpush1.bf16.msra.mxu0 %v498
    %689 = vmatprep.subr.bf16.mxu0 0
    %690 = vmatpush1.bf16.msra.mxu0 %v499
    %691 = vmatprep.subr.bf16.mxu0 0
    %692 = vmatpush1.bf16.msra.mxu0 %v500
    %693 = vmatprep.mubr.bf16.mxu0 %v59
    %694 = vmatmul.mubr.bf16.gmra.mrb[0].mxu0 %v58
    %v695 = vpop.f32.mrb[0].mxu0
    %v696 = vadd.f32 %v656, %v695
    %v697 = vpop.f32.mrb[0].mxu0
    %v698 = vpop.f32.mrb[0].mxu0
    %v699 = vpop.f32.mrb[0].mxu0
    %700 = vdwg.mxu0
    %701 = vmatprep.subr.bf16.mxu0 0
    %702 = vmatpush1.bf16.msra.mxu0 %v501
    %703 = vmatprep.subr.bf16.mxu0 0
    %704 = vmatpush1.bf16.msra.mxu0 %v502
    %705 = vmatprep.subr.bf16.mxu0 0
    %706 = vmatpush1.bf16.msra.mxu0 %v503
    %707 = vmatprep.subr.bf16.mxu0 0
    %708 = vmatpush1.bf16.msra.mxu0 %v504
    %709 = vmatprep.subr.bf16.mxu0 0
    %710 = vmatpush1.bf16.msra.mxu0 %v505
    %711 = vmatprep.subr.bf16.mxu0 0
    %712 = vmatpush1.bf16.msra.mxu0 %v506
    %713 = vmatprep.subr.bf16.mxu0 0
    %714 = vmatpush1.bf16.msra.mxu0 %v507
    %715 = vmatprep.subr.bf16.mxu0 0
    %716 = vmatpush1.bf16.msra.mxu0 %v508
    %717 = vmatprep.subr.bf16.mxu0 0
    %718 = vmatpush1.bf16.msra.mxu0 %v509
    %719 = vmatprep.subr.bf16.mxu0 0
    %720 = vmatpush1.bf16.msra.mxu0 %v510
    %721 = vmatprep.subr.bf16.mxu0 0
    %722 = vmatpush1.bf16.msra.mxu0 %v511
    %723 = vmatprep.subr.bf16.mxu0 0
    %724 = vmatpush1.bf16.msra.mxu0 %v512
    %725 = vmatprep.subr.bf16.mxu0 0
    %726 = vmatpush1.bf16.msra.mxu0 %v513
    %727 = vmatprep.subr.bf16.mxu0 0
    %728 = vmatpush1.bf16.msra.mxu0 %v514
    %729 = vmatprep.subr.bf16.mxu0 0
    %730 = vmatpush1.bf16.msra.mxu0 %v515
    %731 = vmatprep.subr.bf16.mxu0 0
    %732 = vmatpush1.bf16.msra.mxu0 %v516
    %733 = vmatprep.mubr.bf16.mxu0 %v61
    %734 = vmatmul.mubr.bf16.gmra.mrb[0].mxu0 %v60
    %v735 = vpop.f32.mrb[0].mxu0
    %v736 = vadd.f32 %v696, %v735
    %v737 = vpop.f32.mrb[0].mxu0
    %v738 = vpop.f32.mrb[0].mxu0
    %v739 = vpop.f32.mrb[0].mxu0
    %740 = vdwg.mxu0
    %741 = vst [vmem:[#allocation7] sm:$0xff] %v736
    %742 = vxpose.xlu0.b32.start [1/16] %v736, 128
    %743 = vxpose.xlu0.b32.cont [2/16] 0.0, 128
    %744 = vxpose.xlu0.b32.cont [3/16] 0.0, 128
    %745 = vxpose.xlu0.b32.cont [4/16] 0.0, 128
    %746 = vxpose.xlu0.b32.cont [5/16] 0.0, 128
    %747 = vxpose.xlu0.b32.cont [6/16] 0.0, 128
    %748 = vxpose.xlu0.b32.cont [7/16] 0.0, 128
    %749 = vxpose.xlu0.b32.cont [8/16] 0.0, 128
    %750 = vxpose.xlu0.b32.cont [9/16] 0.0, 128
    %751 = vxpose.xlu0.b32.cont [10/16] 0.0, 128
    %752 = vxpose.xlu0.b32.cont [11/16] 0.0, 128
    %753 = vxpose.xlu0.b32.cont [12/16] 0.0, 128
    %754 = vxpose.xlu0.b32.cont [13/16] 0.0, 128
    %755 = vxpose.xlu0.b32.cont [14/16] 0.0, 128
    %756 = vxpose.xlu0.b32.cont [15/16] 0.0, 128
    %757 = vxpose.xlu0.b32.end [16/16] 0.0, 128
    %v758 = vpop.trf.xlu0
    %v759 = vpop.trf.xlu0
    %v760 = vpop.trf.xlu0
    %v761 = vpop.trf.xlu0
    %v762 = vpop.trf.xlu0
    %v763 = vpop.trf.xlu0
    %v764 = vpop.trf.xlu0
    %v765 = vpop.trf.xlu0
    %v766 = vpop.trf.xlu0
    %v767 = vpop.trf.xlu0
    %v768 = vpop.trf.xlu0
    %v769 = vpop.trf.xlu0
    %v770 = vpop.trf.xlu0
    %v771 = vpop.trf.xlu0
    %v772 = vpop.trf.xlu0
    %v773 = vpop.trf.xlu0
    %vm774 = vcmask 64512
    %v775 = vsel %vm774, %v758, -inf
    %v776 = vsel %vm774, %v759, -inf
    %v777 = vsel %vm774, %v760, -inf
    %v778 = vsel %vm774, %v761, -inf
    %v779 = vsel %vm774, %v762, -inf
    %v780 = vmax.f32 %v775, %v779
    %v781 = vsel %vm774, %v763, -inf
    %v782 = vmax.f32 %v776, %v781
    %v783 = vsel %vm774, %v764, -inf
    %v784 = vmax.f32 %v777, %v783
    %v785 = vsel %vm774, %v765, -inf
    %v786 = vmax.f32 %v778, %v785
    %v787 = vsel %vm774, %v766, -inf
    %v788 = vmax.f32 %v780, %v787
    %v789 = vsel %vm774, %v767, -inf
    %v790 = vmax.f32 %v782, %v789
    %v791 = vsel %vm774, %v768, -inf
    %v792 = vmax.f32 %v784, %v791
    %v793 = vsel %vm774, %v769, -inf
    %v794 = vmax.f32 %v786, %v793
    %v795 = vsel %vm774, %v770, -inf
    %v796 = vmax.f32 %v788, %v795
    %v797 = vsel %vm774, %v771, -inf
    %v798 = vmax.f32 %v790, %v797
    %v799 = vsel %vm774, %v772, -inf
    %v800 = vmax.f32 %v792, %v799
    %v801 = vsel %vm774, %v773, -inf
    %v802 = vmax.f32 %v794, %v801
    %v803 = vmax.f32 %v796, %v798
    %v804 = vmax.f32 %v800, %v802
    %v805 = vmax.f32 %v803, %v804
    %v806 = vrot.slane %v805, 4
    %v807 = vmax.f32 %v805, %v806
    %v808 = vrot.slane %v807, 2
    %v809 = vmax.f32 %v807, %v808
    %v810 = vrot.slane %v809, 1
    %v811 = vmax.f32 %v809, %v810
    %v812 = vsub.f32 %v758, %v811
    %v813 = vsub.f32 %v759, %v811
    %v814 = vsub.f32 %v760, %v811
    %v815 = vsub.f32 %v761, %v811
    %v816 = vsub.f32 %v762, %v811
    %v817 = vsub.f32 %v763, %v811
    %v818 = vsub.f32 %v764, %v811
    %v819 = vsub.f32 %v765, %v811
    %v820 = vsub.f32 %v766, %v811
    %v821 = vsub.f32 %v767, %v811
    %v822 = vsub.f32 %v768, %v811
    %v823 = vsub.f32 %v769, %v811
    %v824 = vsub.f32 %v770, %v811
    %v825 = vsub.f32 %v771, %v811
    %v826 = vsub.f32 %v772, %v811
    %v827 = vsub.f32 %v773, %v811
    %v828 = vmul.f32 %v812, 1.442695
    %v829 = vpow.pop %v828
    %v830 = vmul.f32 %v813, 1.442695
    %v831 = vpow.pop %v830
    %v832 = vmul.f32 %v814, 1.442695
    %v833 = vpow.pop %v832
    %v834 = vmul.f32 %v815, 1.442695
    %v835 = vpow.pop %v834
    %v836 = vmul.f32 %v816, 1.442695
    %v837 = vpow.pop %v836
    %v838 = vmul.f32 %v817, 1.442695
    %v839 = vpow.pop %v838
    %v840 = vmul.f32 %v818, 1.442695
    %v841 = vpow.pop %v840
    %v842 = vmul.f32 %v819, 1.442695
    %v843 = vpow.pop %v842
    %v844 = vmul.f32 %v820, 1.442695
    %v845 = vpow.pop %v844
    %v846 = vmul.f32 %v821, 1.442695
    %v847 = vpow.pop %v846
    %v848 = vmul.f32 %v822, 1.442695
    %v849 = vpow.pop %v848
    %v850 = vmul.f32 %v823, 1.442695
    %v851 = vpow.pop %v850
    %v852 = vmul.f32 %v824, 1.442695
    %v853 = vpow.pop %v852
    %v854 = vmul.f32 %v825, 1.442695
    %v855 = vpow.pop %v854
    %v856 = vmul.f32 %v826, 1.442695
    %v857 = vpow.pop %v856
    %v858 = vmul.f32 %v827, 1.442695
    %v859 = vpow.pop %v858
    %v860 = vsel %vm774, %v829, 0.0
    %v861 = vsel %vm774, %v831, 0.0
    %v862 = vadd.f32 %v860, %v861
    %v863 = vsel %vm774, %v833, 0.0
    %v864 = vadd.f32 %v862, %v863
    %v865 = vsel %vm774, %v835, 0.0
    %v866 = vadd.f32 %v864, %v865
    %v867 = vsel %vm774, %v837, 0.0
    %v868 = vadd.f32 %v866, %v867
    %v869 = vsel %vm774, %v839, 0.0
    %v870 = vadd.f32 %v868, %v869
    %v871 = vsel %vm774, %v841, 0.0
    %v872 = vadd.f32 %v870, %v871
    %v873 = vsel %vm774, %v843, 0.0
    %v874 = vadd.f32 %v872, %v873
    %v875 = vsel %vm774, %v845, 0.0
    %v876 = vadd.f32 %v874, %v875
    %v877 = vsel %vm774, %v847, 0.0
    %v878 = vadd.f32 %v876, %v877
    %v879 = vsel %vm774, %v849, 0.0
    %v880 = vadd.f32 %v878, %v879
    %v881 = vsel %vm774, %v851, 0.0
    %v882 = vadd.f32 %v880, %v881
    %v883 = vsel %vm774, %v853, 0.0
    %v884 = vadd.f32 %v882, %v883
    %v885 = vsel %vm774, %v855, 0.0
    %v886 = vadd.f32 %v884, %v885
    %v887 = vsel %vm774, %v857, 0.0
    %v888 = vadd.f32 %v886, %v887
    %v889 = vsel %vm774, %v859, 0.0
    %v890 = vadd.f32 %v888, %v889
    %v891 = vrot.slane %v890, 4
    %v892 = vadd.f32 %v890, %v891
    %v893 = vrot.slane %v892, 2
    %v894 = vadd.f32 %v892, %v893
    %v895 = vrot.slane %v894, 1
    %v896 = vadd.f32 %v894, %v895
    %v897 = vrcp.pop %v896
    %v898 = vlaneseq
    %v899 = vshrl.u32 %v898, 7
    %v900 = vadd.s32 %v899, 8
    %v901 = vadd.s32 %v899, 16
    %v902 = vadd.s32 %v899, 24
    %v903 = vadd.s32 %v899, 32
    %v904 = vadd.s32 %v899, 40
    %v905 = vadd.s32 %v899, 48
    %v906 = vadd.s32 %v899, 56
    %v907 = vadd.s32 %v899, 64
    %v908 = vadd.s32 %v899, 72
    %v909 = vadd.s32 %v899, 80
    %v910 = vadd.s32 %v899, 88
    %v911 = vadd.s32 %v899, 96
    %v912 = vadd.s32 %v899, 104
    %v913 = vadd.s32 %v899, 112
    %v914 = vadd.s32 %v899, 120
    %v915 = vcvt.s32.f32 %v899
    %v916 = vcvt.s32.f32 %v900
    %v917 = vcvt.s32.f32 %v901
    %v918 = vcvt.s32.f32 %v902
    %v919 = vcvt.s32.f32 %v903
    %v920 = vcvt.s32.f32 %v904
    %v921 = vcvt.s32.f32 %v905
    %v922 = vcvt.s32.f32 %v906
    %v923 = vcvt.s32.f32 %v907
    %v924 = vcvt.s32.f32 %v908
    %v925 = vcvt.s32.f32 %v909
    %v926 = vcvt.s32.f32 %v910
    %v927 = vcvt.s32.f32 %v911
    %v928 = vcvt.s32.f32 %v912
    %v929 = vcvt.s32.f32 %v913
    %v930 = vcvt.s32.f32 %v914
    %vm931 = vcmp.eq.f32.partialorder %v758, %v811
    %vm932 = vcmp.eq.f32.partialorder %v759, %v811
    %vm933 = vcmp.eq.f32.partialorder %v760, %v811
    %vm934 = vcmp.eq.f32.partialorder %v761, %v811
    %vm935 = vcmp.eq.f32.partialorder %v762, %v811
    %vm936 = vcmp.eq.f32.partialorder %v763, %v811
    %vm937 = vcmp.eq.f32.partialorder %v764, %v811
    %vm938 = vcmp.eq.f32.partialorder %v765, %v811
    %vm939 = vcmp.eq.f32.partialorder %v766, %v811
    %vm940 = vcmp.eq.f32.partialorder %v767, %v811
    %vm941 = vcmp.eq.f32.partialorder %v768, %v811
    %vm942 = vcmp.eq.f32.partialorder %v769, %v811
    %vm943 = vcmp.eq.f32.partialorder %v770, %v811
    %vm944 = vcmp.eq.f32.partialorder %v771, %v811
    %vm945 = vcmp.eq.f32.partialorder %v772, %v811
    %vm946 = vcmp.eq.f32.partialorder %v773, %v811
    %v947 = vsel %vm931, %v915, 128.0
    %v948 = vsel %vm932, %v916, 128.0
    %v949 = vsel %vm933, %v917, 128.0
    %v950 = vsel %vm934, %v918, 128.0
    %v951 = vsel %vm935, %v919, 128.0
    %v952 = vsel %vm936, %v920, 128.0
    %v953 = vsel %vm937, %v921, 128.0
    %v954 = vsel %vm938, %v922, 128.0
    %v955 = vsel %vm939, %v923, 128.0
    %v956 = vsel %vm940, %v924, 128.0
    %v957 = vsel %vm941, %v925, 128.0
    %v958 = vsel %vm942, %v926, 128.0
    %v959 = vsel %vm943, %v927, 128.0
    %v960 = vsel %vm944, %v928, 128.0
    %v961 = vsel %vm945, %v929, 128.0
    %v962 = vsel %vm946, %v930, 128.0
    %v963 = vsel %vm774, %v947, inf
    %v964 = vsel %vm774, %v948, inf
    %v965 = vsel %vm774, %v949, inf
    %v966 = vsel %vm774, %v950, inf
    %v967 = vsel %vm774, %v951, inf
    %v968 = vmin.f32 %v963, %v967
    %v969 = vsel %vm774, %v952, inf
    %v970 = vmin.f32 %v964, %v969
    %v971 = vsel %vm774, %v953, inf
    %v972 = vmin.f32 %v965, %v971
    %v973 = vsel %vm774, %v954, inf
    %v974 = vmin.f32 %v966, %v973
    %v975 = vsel %vm774, %v955, inf
    %v976 = vmin.f32 %v968, %v975
    %v977 = vsel %vm774, %v956, inf
    %v978 = vmin.f32 %v970, %v977
    %v979 = vsel %vm774, %v957, inf
    %v980 = vmin.f32 %v972, %v979
    %v981 = vsel %vm774, %v958, inf
    %v982 = vmin.f32 %v974, %v981
    %v983 = vsel %vm774, %v959, inf
    %v984 = vmin.f32 %v976, %v983
    %v985 = vsel %vm774, %v960, inf
    %v986 = vmin.f32 %v978, %v985
    %v987 = vsel %vm774, %v961, inf
    %v988 = vmin.f32 %v980, %v987
    %v989 = vsel %vm774, %v962, inf
    %v990 = vmin.f32 %v982, %v989
    %v991 = vmin.f32 %v984, %v986
    %v992 = vmin.f32 %v988, %v990
    %v993 = vmin.f32 %v991, %v992
    %v994 = vrot.slane %v993, 4
    %v995 = vmin.f32 %v993, %v994
    %v996 = vrot.slane %v995, 2
    %v997 = vmin.f32 %v995, %v996
    %v998 = vrot.slane %v997, 1
    %v999 = vmin.f32 %v997, %v998
    %v1000 = vcvt.f32.s32.to.zero.pseudo %v999
    %vm1001 = vcmask 57344
    %1002 = vst.msk [vmem:[#allocation8] sm:$0x1] %vm1001, %v1000
    %1003 = vst.msk [vmem:[#allocation10] sm:$0x1] %vm1001, %v897
    // Predicated region
    $region22: #{tpu_custom_call.1} parent=1 // pred_check
      _
    $region23: #{tpu_custom_call.1} parent=1 // pred_check_branch
      %1005 = sbr.rel (0) target = $region25
    $region24: #{tpu_custom_call.1} parent=1 // pred_region
      %s1007 = ssub.s32 128, 128
      %1008 = vsyncadd [#allocation4], %s1007
      %s1010 = sshll.u32 [#allocation7], 4
      %s1011 = int_to_ptr.vmem [resolvable:$true] %s1010
      %1013 = dma.vmem_to_hbm [thread:$0]  %s1011, 128, %s3, [#allocation4]
    $region25: #{tpu_custom_call.1} parent=1 // pred_fallthru
      _
    // Predicated region
    $region26: #{tpu_custom_call.1} parent=1 // pred_check
      _
    $region27: #{tpu_custom_call.1} parent=1 // pred_check_branch
      %1015 = sbr.rel (0) target = $region29
    $region28: #{tpu_custom_call.1} parent=1 // pred_region
      %s1017 = ssub.s32 16, 16
      %1018 = vsyncadd [#allocation9], %s1017
      %s1020 = sshll.u32 [#allocation8], 4
      %s1021 = int_to_ptr.vmem [resolvable:$true] %s1020
      %1023 = dma.vmem_to_hbm [thread:$0]  %s1021, 16, %s4, [#allocation9]
    $region29: #{tpu_custom_call.1} parent=1 // pred_fallthru
      _
    // Predicated region
    $region30: #{tpu_custom_call.1} parent=1 // pred_check
      _
    $region31: #{tpu_custom_call.1} parent=1 // pred_check_branch
      %1025 = sbr.rel (0) target = $region33
    $region32: #{tpu_custom_call.1} parent=1 // pred_region
      %s1027 = ssub.s32 16, 16
      %1028 = vsyncadd [#allocation9], %s1027
      %s1030 = sshll.u32 [#allocation10], 4
      %s1031 = int_to_ptr.vmem [resolvable:$true] %s1030
      %1033 = dma.vmem_to_hbm [thread:$0]  %s1031, 16, %s5, [#allocation9]
    $region33: #{tpu_custom_call.1} parent=1 // pred_fallthru
      _
    // Predicated region
    $region34: #{tpu_custom_call.1} parent=1 // pred_check
      _
    $region35: #{tpu_custom_call.1} parent=1 // pred_check_branch
      %1035 = sbr.rel (0) target = $region37
    $region36: #{tpu_custom_call.1} parent=1 // pred_region
      %1036 = dma.done [#allocation4], 128
    $region37: #{tpu_custom_call.1} parent=1 // pred_fallthru
      _
    // Predicated region
    $region38: #{tpu_custom_call.1} parent=1 // pred_check
      _
    $region39: #{tpu_custom_call.1} parent=1 // pred_check_branch
      %1038 = sbr.rel (0) target = $region41
    $region40: #{tpu_custom_call.1} parent=1 // pred_region
      %1039 = dma.done [#allocation9], 16
    $region41: #{tpu_custom_call.1} parent=1 // pred_fallthru
      _
    // Predicated region
    $region42: #{tpu_custom_call.1} parent=1 // pred_check
      _
    $region43: #{tpu_custom_call.1} parent=1 // pred_check_branch
      %1041 = sbr.rel (0) target = $region45
    $region44: #{tpu_custom_call.1} parent=1 // pred_region
      %1042 = dma.done [#allocation9], 16
    $region45: #{tpu_custom_call.1} parent=1 // pred_fallthru
      _
    %1043 = vsyncpa [#allocation3], 1
    %1044 = vsyncpa [#allocation6], 1
    %1045 = vsyncpa [#allocation4], 1
    %1046 = vsyncpa [#allocation9], 1

</llo_original>
